<compile_context>
chip_gen: v5e
topology: v5e:2x2
jax: 0.10.0
libtpu: 0.0.40
codegen_flags: <defaults>
</compile_context>

<pallas_src>
import math

import jax
import jax.numpy as jnp
from jax.experimental import pallas as pl
from jax.experimental.pallas import tpu as pltpu

_LANES = 128
# ~4 MiB per input tile: amortizes the ~0.35 us per-grid-step overhead on v6e
# and keeps the step time comfortably above it even at v7x's 3.2 TB/s HBM.
_MAX_TILE_BYTES = 4 * 1024 * 1024
# Split the reduction stream across (up to) this many TensorCores via a leading
# "parallel" grid axis.  v7x has 2 TCs/chip; on v5e/v6e (1 TC/chip) the extra
# axis just iterates sequentially on the same core.
_NUM_CORE_SPLITS = 2
# Accumulator block height: 64 rows x 128 lanes = 8 f32 vregs of independent
# accumulators -> enough VPU ILP that the fold never becomes the critical path.
_ACC_ROWS = 64


def _round_up(x, m):
    return ((x + m - 1) // m) * m


def _sublane_multiple(dtype):
    """Packed-tile sublane granularity: 8 for 4-byte, 16 for 2-byte, 32 for 1-byte."""
    return max(8, 32 // jnp.dtype(dtype).itemsize)


def _make_kernel(rows, tile_rows, acc_rows, inner, need_mask):
    n_fold = tile_rows // acc_rows

    def kernel(w_ref, x_ref, o_ref):
        c = pl.program_id(0)   # core-split axis ("parallel")
        i = pl.program_id(1)   # row-block stream (reduction, "arbitrary")

        @pl.when(i == 0)
        def _init():
            o_ref[...] = jnp.zeros_like(o_ref)

        # Load in the HBM-resident dtype, upcast to f32 for accumulation
        # (v5e has no bf16 VALUs; f32 accumulate is correct on all generations).
        prod = w_ref[...].astype(jnp.float32) * x_ref[...].astype(jnp.float32)

        if need_mask:
            # Zero rows past the valid range (ragged last block, and any
            # clamped duplicate block on the second core split).
            start = (c * inner + i) * tile_rows
            row_ids = start + jax.lax.broadcasted_iota(
                jnp.int32, (tile_rows, 1), 0)
            prod = jnp.where(row_ids < rows, prod, 0.0)

        # Fold the tile into the 8-vreg accumulator block.  The trailing
        # (acc_rows, 128) dims keep the native (8,128) tiling, so the axis-0
        # sum is pure elementwise vreg adds (no XLU traffic in the hot loop).
        o_ref[...] += prod.reshape(n_fold, acc_rows, _LANES).sum(axis=0)

    return kernel


def dummynet_forward(torch0, torch1):
    """Returns the scalar loss0 = ((torch0 * torch1).sum() + 1) - 1."""
    assert torch0.shape == torch1.shape, (torch0.shape, torch1.shape)

    w_flat = torch0.reshape(-1)
    x_flat = torch1.reshape(-1)
    n_elem = w_flat.shape[0]

    rows = n_elem // _LANES
    rem = n_elem - rows * _LANES

    # Sub-128-element remainder: tiny, handled outside the kernel so the bulk
    # input never gets padded/copied just to become lane-aligned.
    tail = jnp.float32(0.0)
    if rem:
        tail = jnp.sum(
            w_flat[rows * _LANES:].astype(jnp.float32)
            * x_flat[rows * _LANES:].astype(jnp.float32))
        w_flat = w_flat[: rows * _LANES]
        x_flat = x_flat[: rows * _LANES]

    if rows == 0:
        total = tail
    else:
        w2d = w_flat.reshape(rows, _LANES)   # free reshape, no HBM copy
        x2d = x_flat.reshape(rows, _LANES)

        # Dtype-aware sublane granularity (f32: 8, bf16: 16, int8/fp8: 32).
        sublane = max(_sublane_multiple(w2d.dtype), _sublane_multiple(x2d.dtype))
        # Round tiles to the accumulator height when possible so acc_rows = 64
        # (64 is a multiple of every sublane granularity); tiny inputs only
        # need the sublane multiple.
        round_unit = _ACC_ROWS if rows >= _ACC_ROWS else sublane

        row_bytes = _LANES * max(w2d.dtype.itemsize, x2d.dtype.itemsize)
        max_tile_rows = max(
            round_unit, (_MAX_TILE_BYTES // row_bytes) // round_unit * round_unit)

        # Adaptive tile size: spread rows evenly over the minimal tile count so
        # the last (masked) block wastes at most a few rows of compute, and no
        # DMA bytes at all (partial blocks only transfer the in-bounds region).
        n_tiles = pl.cdiv(rows, max_tile_rows)
        tile_rows = min(_round_up(pl.cdiv(rows, n_tiles), round_unit),
                        max_tile_rows)
        n_blocks = pl.cdiv(rows, tile_rows)
        acc_rows = math.gcd(tile_rows, _ACC_ROWS)

        num_splits = _NUM_CORE_SPLITS if n_blocks >= _NUM_CORE_SPLITS else 1
        inner = pl.cdiv(n_blocks, num_splits)
        need_mask = (num_splits * inner * tile_rows) != rows

        if num_splits * inner == n_blocks:
            def row_block(c, i):
                return (c * inner + i, 0)
        else:
            last_block = n_blocks - 1

            def row_block(c, i):
                # Clamp the overflow block(s) of the last core split in-range;
                # their contribution is zeroed by the in-kernel row mask.
                return (jnp.minimum(c * inner + i, last_block), 0)

        in_spec = pl.BlockSpec((tile_rows, _LANES), row_block)

        # Explicit VMEM budget: 2x double-buffered input tiles for w and x,
        # the f32 product temporary, the resident output block, plus slack.
        vmem_limit = (
            2 * tile_rows * _LANES * (w2d.dtype.itemsize + x2d.dtype.itemsize)
            + tile_rows * _LANES * 4
            + 2 * acc_rows * _LANES * 4
            + (4 << 20))
        vmem_limit = int(min(max(vmem_limit, 16 << 20), 48 << 20))

        bytes_accessed = int(
            w2d.size * w2d.dtype.itemsize
            + x2d.size * x2d.dtype.itemsize
            + num_splits * acc_rows * _LANES * 4)

        out = pl.pallas_call(
            _make_kernel(rows, tile_rows, acc_rows, inner, need_mask),
            out_shape=jax.ShapeDtypeStruct(
                (num_splits * acc_rows, _LANES), jnp.float32),
            grid_spec=pltpu.PrefetchScalarGridSpec(
                num_scalar_prefetch=0,
                grid=(num_splits, inner),
                in_specs=[in_spec, in_spec],
                # One lane-dense partial-sum block per core split; it stays
                # resident in VMEM across the inner (reduction) axis.
                out_specs=pl.BlockSpec((acc_rows, _LANES), lambda c, i: (c, 0)),
            ),
            compiler_params=pltpu.CompilerParams(
                dimension_semantics=("parallel", "arbitrary"),
                vmem_limit_bytes=vmem_limit,
            ),
            cost_estimate=pl.CostEstimate(
                flops=2 * n_elem, transcendentals=0,
                bytes_accessed=bytes_accessed),
        )(w2d, x2d)

        # Tiny epilogue reduce over the <= (128, 128) f32 partial-sum slab.
        total = jnp.sum(out) + tail

    torch2 = total + 1.0      # torch2 = (torch0 * torch1).sum() + 1
    loss0 = torch2 - 1.0      # loss0 = torch2 - 1
    return loss0


if __name__ == "__main__":
    key = jax.random.PRNGKey(0)
    k_w, k_x = jax.random.split(key)

    # Small NCHW shapes consistent with the module.
    shape = (2, 4, 16, 16)
    torch0 = jax.random.normal(k_w, shape, dtype=jnp.float32)  # the Parameter
    torch1 = jax.random.normal(k_x, shape, dtype=jnp.float32)  # the input

    forward = jax.jit(dummynet_forward)
    loss0 = jax.block_until_ready(forward(torch0, torch1))

    # Pure-JAX reference.
    ref = ((torch0 * torch1).sum() + 1.0) - 1.0
    assert jnp.allclose(loss0, ref, rtol=1e-5, atol=1e-5), (loss0, ref)

    print("KERNEL_OK")
</pallas_src>

<mosaic_0001>
module attributes {stable_mosaic.version = 11 : i64} {
  func.func @kernel(%arg0: i32, %arg1: i32, %arg2: memref<16x128xf32, #tpu.memory_space<vmem>>, %arg3: memref<16x128xf32, #tpu.memory_space<vmem>>, %arg4: memref<16x128xf32, #tpu.memory_space<vmem>>) attributes {dimension_semantics = [#tpu.dimension_semantics<parallel>, #tpu.dimension_semantics<arbitrary>], iteration_bounds = array<i64: 1, 1>, scalar_prefetch = 0 : i64, scratch_operands = 0 : i64, tpu.core_type = #tpu.core_type<tc>, window_params = [{transform_indices = @transform_0, window_bounds = array<i64: 16, 128>}, {transform_indices = @transform_1, window_bounds = array<i64: 16, 128>}, {transform_indices = @transform_2, window_bounds = array<i64: 16, 128>}]} {
    %c0_i32 = arith.constant 0 : i32
    %0 = arith.cmpi eq, %arg1, %c0_i32 : i32
    %1 = arith.extui %0 : i1 to i32
    %c0_i32_0 = arith.constant 0 : i32
    %2 = arith.cmpi ne, %1, %c0_i32_0 : i32
    scf.if %2 {
      %cst_8 = arith.constant 0.000000e+00 : f32
      %11 = vector.broadcast %cst_8 : f32 to vector<16x128xf32>
      %c0_9 = arith.constant 0 : index
      %c0_10 = arith.constant 0 : index
      %12 = vector.load %arg4[%c0_9, %c0_10] : memref<16x128xf32, #tpu.memory_space<vmem>>, vector<16x128xf32>
      tpu.vector_store %arg4[%c0_9, %c0_10], %11 {strides = array<i32>} : memref<16x128xf32, #tpu.memory_space<vmem>>, vector<16x128xf32>,
    } else {
    }
    %c0 = arith.constant 0 : index
    %c0_1 = arith.constant 0 : index
    %3 = vector.load %arg2[%c0, %c0_1] : memref<16x128xf32, #tpu.memory_space<vmem>>, vector<16x128xf32>
    %c0_2 = arith.constant 0 : index
    %c0_3 = arith.constant 0 : index
    %4 = vector.load %arg3[%c0_2, %c0_3] : memref<16x128xf32, #tpu.memory_space<vmem>>, vector<16x128xf32>
    %5 = arith.mulf %3, %4 : vector<16x128xf32>
    %c0_4 = arith.constant 0 : index
    %c0_5 = arith.constant 0 : index
    %6 = vector.load %arg4[%c0_4, %c0_5] : memref<16x128xf32, #tpu.memory_space<vmem>>, vector<16x128xf32>
    %7 = vector.shape_cast %5 : vector<16x128xf32> to vector<1x16x128xf32>
    %cst = arith.constant dense<0.000000e+00> : vector<16x128xf32>
    %8 = vector.multi_reduction <add>, %7, %cst [0] : vector<1x16x128xf32> to vector<16x128xf32>
    %9 = arith.addf %6, %8 : vector<16x128xf32>
    %c0_6 = arith.constant 0 : index
    %c0_7 = arith.constant 0 : index
    %10 = vector.load %arg4[%c0_6, %c0_7] : memref<16x128xf32, #tpu.memory_space<vmem>>, vector<16x128xf32>
    tpu.vector_store %arg4[%c0_6, %c0_7], %9 {strides = array<i32>} : memref<16x128xf32, #tpu.memory_space<vmem>>, vector<16x128xf32>,
    return
  }
  func.func @transform_0(%arg0: i32, %arg1: i32) -> (i32, i32) {
    %c1_i32 = arith.constant 1 : i32
    %0 = arith.muli %arg0, %c1_i32 : i32
    %1 = arith.addi %0, %arg1 : i32
    %c0_i32 = arith.constant 0 : i32
    %c0_i32_0 = arith.constant 0 : i32
    return %1, %c0_i32 : i32, i32
  }
  func.func @transform_1(%arg0: i32, %arg1: i32) -> (i32, i32) {
    %c1_i32 = arith.constant 1 : i32
    %0 = arith.muli %arg0, %c1_i32 : i32
    %1 = arith.addi %0, %arg1 : i32
    %c0_i32 = arith.constant 0 : i32
    %c0_i32_0 = arith.constant 0 : i32
    return %1, %c0_i32 : i32, i32
  }
  func.func @transform_2(%arg0: i32, %arg1: i32) -> (i32, i32) {
    %c0_i32 = arith.constant 0 : i32
    %c0_i32_0 = arith.constant 0 : i32
    return %arg0, %c0_i32 : i32, i32
  }
}

</mosaic_0001>

<llo_original>
// kernel: dummynet_forward.1
$region0: #{dummynet_forward.1}
  #allocation0 [shape = 'u32[]', space=smem, size = 0x4, offset = 0x4, fixed_abs, tag = 'smem constant byte address 0x4 - core index']
  #allocation1 [shape = 'u32[72,128]{1,0:T(1,128)}', space=vmem, size = 0x9000, scoped, tag = 'internal scratch']
  %s0 = inlined_call_operand.vmem [shape: f32[16,128], index: 0, kind: input, shape index: {}]
  %s1 = inlined_call_operand.vmem [shape: f32[16,128], index: 1, kind: input, shape index: {}]
  %s2 = inlined_call_operand.vmem [shape: f32[16,128], index: 2, kind: output, shape index: {}]
  %s3 = sld [smem:[#allocation0]]
  $region22: #{dummynet_forward.1} parent=0
    _
  %s5 = ssub.s32 1, %s3
  %s6 = scalar_select 0, %s5, %s3
  // Predicated region
  $region2: #{dummynet_forward.1} parent=0 // pred_check
    _
  $region3: #{dummynet_forward.1} parent=0 // pred_check_branch
    %8 = sbr.rel (0) target = $region5
  $region4: #{dummynet_forward.1} parent=0 // pred_region
    %s9 = sadd.s32 0, 0
    %s10 = smul.u32 2, %s9
    %p11 = scmp.lt.s32.totalorder %s10, 1
    %s12 = scalar_select %p11, %s10, 1
    %s13 = smul.addr %s12, 8
    %s14 = scalar_lea.vmem %s0, %s13
    %s15 = sadd.s32 0, 0
    %s16 = smul.u32 2, %s15
  $region5: #{dummynet_forward.1} parent=0 // pred_fallthru
    _
  // Predicated region
  $region6: #{dummynet_forward.1} parent=0 // pred_check
    _
  $region7: #{dummynet_forward.1} parent=0 // pred_check_branch
    %18 = sbr.rel (0) target = $region9
  $region8: #{dummynet_forward.1} parent=0 // pred_region
    %s19 = sadd.s32 0, 0
    %s20 = smul.u32 2, %s19
    %p21 = scmp.lt.s32.totalorder %s20, 1
    %s22 = scalar_select %p21, %s20, 1
    %s23 = smul.addr %s22, 8
    %s24 = scalar_lea.vmem %s1, %s23
    %s25 = sadd.s32 0, 0
    %s26 = smul.u32 2, %s25
  $region9: #{dummynet_forward.1} parent=0 // pred_fallthru
    _
  %s27 = sadd.s32 0, 0
  %s28 = smul.u32 2, %s27
  %p29 = scmp.lt.s32.totalorder %s28, 1
  %s30 = scalar_select %p29, %s28, 1
  %s31 = smul.addr %s30, 8
  %s32 = scalar_lea.vmem %s0, %s31
  %s33 = sadd.s32 0, 0
  %s34 = smul.u32 2, %s33
  %p35 = scmp.lt.s32.totalorder %s34, 1
  %s36 = scalar_select %p35, %s34, 1
  %s37 = smul.addr %s36, 8
  %s38 = scalar_lea.vmem %s1, %s37
  %s39 = sadd.s32 0, 0
  %s40 = smul.u32 2, %s39
  %p41 = scmp.lt.s32.totalorder %s40, 1
  %s42 = scalar_select %p41, %s40, 1
  %s43 = smul.addr %s42, 8
  %s44 = scalar_lea.vmem %s0, %s43
  %s45 = sadd.s32 0, 0
  %s46 = smul.u32 2, %s45
  %s47 = sadd.s32 0, 0
  %s48 = smul.u32 2, %s47
  %p49 = scmp.lt.s32.totalorder %s48, 1
  %s50 = scalar_select %p49, %s48, 1
  %s51 = smul.addr %s50, 8
  %s52 = scalar_lea.vmem %s1, %s51
  %s53 = sadd.s32 0, 0
  %s54 = smul.u32 2, %s53
  %p55 = scmp.eq.s32.totalorder 0, 0
  // Predicated region
  $region10: #{dummynet_forward.1} parent=0 // pred_check
    %p56 = pneg %p55
  $region11: #{dummynet_forward.1} parent=0 // pred_check_branch
    %58 = sbr.rel (%p56) target = $region13
  $region12: #{dummynet_forward.1} parent=0 // pred_region
    %59 = vst [vmem:[%s2] sm:$0xff] 0.0
    %60 = vst [vmem:[%s2 + $0x8] sm:$0xff] 0.0
  $region13: #{dummynet_forward.1} parent=0 // pred_fallthru
    _
  %v61 = vld [vmem:[%s44] sm:$0xff]
  %v62 = vld [vmem:[%s44 + $0x8] sm:$0xff]
  %v63 = vld [vmem:[%s52] sm:$0xff]
  %v64 = vld [vmem:[%s52 + $0x8] sm:$0xff]
  %v65 = vmul.f32 %v61, %v63
  %v66 = vmul.f32 %v62, %v64
  %v67 = vld [vmem:[%s2] sm:$0xff]
  %v68 = vld [vmem:[%s2 + $0x8] sm:$0xff]
  %v69 = vadd.f32 %v65, 0.0
  %v70 = vadd.f32 %v66, 0.0
  %v71 = vadd.f32 %v67, %v69
  %v72 = vadd.f32 %v68, %v70
  %73 = vst [vmem:[%s2] sm:$0xff] %v71
  %74 = vst [vmem:[%s2 + $0x8] sm:$0xff] %v72
  // Predicated region
  $region14: #{dummynet_forward.1} parent=0 // pred_check
    _
  $region15: #{dummynet_forward.1} parent=0 // pred_check_branch
    %76 = sbr.rel (0) target = $region17
  $region16: #{dummynet_forward.1} parent=0 // pred_region
    _
  $region17: #{dummynet_forward.1} parent=0 // pred_fallthru
    _
  // Predicated region
  $region18: #{dummynet_forward.1} parent=0 // pred_check
    _
  $region19: #{dummynet_forward.1} parent=0 // pred_check_branch
    %78 = sbr.rel (0) target = $region21
  $region20: #{dummynet_forward.1} parent=0 // pred_region
    _
  $region21: #{dummynet_forward.1} parent=0 // pred_fallthru
    _

</llo_original>
